<compile_context>
chip_gen: v7x
topology: tpu7x:2x2x1
jax: 0.10.0
libtpu: 0.0.40
codegen_flags: <defaults>
</compile_context>

<pallas_src>
import jax
import jax.numpy as jnp
from jax.experimental import pallas as pl
from jax.experimental.pallas import tpu as pltpu

LANE = 128


def _round_up(n, m):
    return ((n + m - 1) // m) * m


def mlp_kernel(x_ref, w1_ref, b1_ref, w2_ref, b2_ref, w3_ref, b3_ref, o_ref):
    x = x_ref[...]
    # Linear(in_var -> features).  in_var == 1 is a degenerate K=1 contraction (an outer
    # product), so do it on the VPU as a broadcast mul+add and keep the MXU free.
    if x.shape[-1] == 1:
        h = x * w1_ref[...] + b1_ref[...]          # (tb,1)*(1,F) + (1,F) -> (tb,F)
    else:
        h = jnp.dot(x, w1_ref[...], preferred_element_type=jnp.float32) + b1_ref[...]
    # Linear(features -> features) + ReLU
    h = jnp.dot(h, w2_ref[...], preferred_element_type=jnp.float32) + b2_ref[...]
    h = jnp.maximum(h, 0.0)
    # Dropout(p=0.35): eval-mode identity.
    # TODO(synk): training-mode dropout would need pltpu.prng_seed/prng_random_bits masking
    #             plus the 1/(1-p) rescale.
    # Linear(features -> final_var)
    o_ref[...] = jnp.dot(h, w3_ref[...], preferred_element_type=jnp.float32) + b3_ref[...]


def layered_model_forward(x, padded_params, final_var, *, block_b=512):
    """x: [batch, in_var] f32.  padded_params: lane-padded (w1, b1, w2, b2, w3, b3)."""
    w1, b1, w2, b2, w3, b3 = padded_params
    batch, in_var = x.shape
    out_p = w3.shape[1]

    # Batch tile: multiple of 8 sublanes; pad batch so the grid divides evenly.
    tb = min(block_b, _round_up(batch, 8))
    padded_batch = _round_up(batch, tb)
    if padded_batch != batch:
        x = jnp.pad(x, ((0, padded_batch - batch), (0, 0)))
    grid = (padded_batch // tb,)

    row_spec = pl.BlockSpec((tb, in_var), lambda i: (i, 0))
    out_spec = pl.BlockSpec((tb, out_p), lambda i: (i, 0))
    # Weights/biases are small: constant index_map keeps them VMEM-resident across all steps.
    const = lambda a: pl.BlockSpec(a.shape, lambda i: (0, 0))

    out = pl.pallas_call(
        mlp_kernel,
        out_shape=jax.ShapeDtypeStruct((padded_batch, out_p), jnp.float32),
        grid=grid,
        in_specs=[
            row_spec,
            const(w1), const(b1),
            const(w2), const(b2),
            const(w3), const(b3),
        ],
        out_specs=out_spec,
        compiler_params=pltpu.CompilerParams(
            dimension_semantics=("parallel",),        # v7x: shard batch tiles over both TCs
            vmem_limit_bytes=32 * 1024 * 1024,        # safe on v5e/v6e (128 MiB) and v7x (64 MiB)
        ),
    )(x, w1, b1, w2, b2, w3, b3)
    return out[:batch, :final_var]


def init_params(key, in_var=1, features=40, final_var=4):
    # PyTorch nn.Linear default init: U(-1/sqrt(fan_in), 1/sqrt(fan_in)).
    def linear(k, fan_in, fan_out):
        kw, kb = jax.random.split(k)
        bound = 1.0 / jnp.sqrt(jnp.asarray(fan_in, jnp.float32))
        w = jax.random.uniform(kw, (fan_in, fan_out), jnp.float32, -bound, bound)
        b = jax.random.uniform(kb, (1, fan_out), jnp.float32, -bound, bound)
        return w, b

    k1, k2, k3 = jax.random.split(key, 3)
    w1, b1 = linear(k1, in_var, features)     # Linear(1, 40)
    w2, b2 = linear(k2, features, features)   # Linear(40, 40)   (layer_count=1)
    w3, b3 = linear(k3, features, final_var)  # Linear(40, 4)
    return (w1, b1, w2, b2, w3, b3)


def pad_params(params, lane=LANE):
    """Zero-pad feature dims to multiples of 128 lanes (unmasked loads/stores, lane-dense
    MXU tiles).  Zero padding keeps the sliced output identical to the unpadded model."""
    w1, b1, w2, b2, w3, b3 = params
    in_var, feat = w1.shape
    fin = w3.shape[1]
    feat_p = _round_up(feat, lane)
    fin_p = _round_up(fin, lane)

    def pad2(a, rows, cols):
        return jnp.pad(a, ((0, rows - a.shape[0]), (0, cols - a.shape[1])))

    return (
        pad2(w1, in_var, feat_p), pad2(b1, 1, feat_p),
        pad2(w2, feat_p, feat_p), pad2(b2, 1, feat_p),
        pad2(w3, feat_p, fin_p),  pad2(b3, 1, fin_p),
    )


if __name__ == "__main__":
    key = jax.random.PRNGKey(0)
    k_params, k_x = jax.random.split(key)

    in_var, features, final_var = 1, 40, 4
    batch = 200  # small; non-multiple of the tile to exercise batch padding + multi-step grid

    params = init_params(k_params, in_var, features, final_var)
    padded = pad_params(params)
    x = jax.random.normal(k_x, (batch, in_var), jnp.float32)

    out = layered_model_forward(x, padded, final_var, block_b=64)
    jax.block_until_ready(out)

    # Plain-JAX reference (eval-mode: Dropout is identity), using the UNPADDED params.
    w1, b1, w2, b2, w3, b3 = params
    h = x @ w1 + b1
    h = jnp.maximum(h @ w2 + b2, 0.0)
    ref = h @ w3 + b3

    assert out.shape == (batch, final_var)
    assert jnp.allclose(out, ref, atol=1e-5, rtol=1e-5)

    print("KERNEL_OK")
</pallas_src>

<mosaic_0001>
module attributes {stable_mosaic.version = 11 : i64} {
  func.func @mlp_kernel(%arg0: i32, %arg1: memref<64x1xf32, #tpu.memory_space<vmem>>, %arg2: memref<1x128xf32, #tpu.memory_space<vmem>>, %arg3: memref<1x128xf32, #tpu.memory_space<vmem>>, %arg4: memref<128x128xf32, #tpu.memory_space<vmem>>, %arg5: memref<1x128xf32, #tpu.memory_space<vmem>>, %arg6: memref<128x128xf32, #tpu.memory_space<vmem>>, %arg7: memref<1x128xf32, #tpu.memory_space<vmem>>, %arg8: memref<64x128xf32, #tpu.memory_space<vmem>>) attributes {dimension_semantics = [#tpu.dimension_semantics<parallel>], iteration_bounds = array<i64: 4>, scalar_prefetch = 0 : i64, scratch_operands = 0 : i64, tpu.core_type = #tpu.core_type<tc>, window_params = [{transform_indices = @transform_0, window_bounds = array<i64: 64, 1>}, {pipeline_mode = #tpu.pipeline_mode<synchronous>, transform_indices = @transform_1, window_bounds = array<i64: 1, 128>}, {pipeline_mode = #tpu.pipeline_mode<synchronous>, transform_indices = @transform_2, window_bounds = array<i64: 1, 128>}, {pipeline_mode = #tpu.pipeline_mode<synchronous>, transform_indices = @transform_3, window_bounds = array<i64: 128, 128>}, {pipeline_mode = #tpu.pipeline_mode<synchronous>, transform_indices = @transform_4, window_bounds = array<i64: 1, 128>}, {pipeline_mode = #tpu.pipeline_mode<synchronous>, transform_indices = @transform_5, window_bounds = array<i64: 128, 128>}, {pipeline_mode = #tpu.pipeline_mode<synchronous>, transform_indices = @transform_6, window_bounds = array<i64: 1, 128>}, {transform_indices = @transform_7, window_bounds = array<i64: 64, 128>}]} {
    %c0 = arith.constant 0 : index
    %c0_0 = arith.constant 0 : index
    %0 = vector.load %arg1[%c0, %c0_0] : memref<64x1xf32, #tpu.memory_space<vmem>>, vector<64x1xf32>
    %c0_1 = arith.constant 0 : index
    %c0_2 = arith.constant 0 : index
    %1 = vector.load %arg2[%c0_1, %c0_2] : memref<1x128xf32, #tpu.memory_space<vmem>>, vector<1x128xf32>
    %2 = vector.broadcast %0 : vector<64x1xf32> to vector<64x128xf32>
    %3 = vector.broadcast %1 : vector<1x128xf32> to vector<64x128xf32>
    %4 = arith.mulf %2, %3 : vector<64x128xf32>
    %c0_3 = arith.constant 0 : index
    %c0_4 = arith.constant 0 : index
    %5 = vector.load %arg3[%c0_3, %c0_4] : memref<1x128xf32, #tpu.memory_space<vmem>>, vector<1x128xf32>
    %6 = vector.broadcast %5 : vector<1x128xf32> to vector<64x128xf32>
    %7 = arith.addf %4, %6 : vector<64x128xf32>
    %c0_5 = arith.constant 0 : index
    %c0_6 = arith.constant 0 : index
    %8 = vector.load %arg4[%c0_5, %c0_6] : memref<128x128xf32, #tpu.memory_space<vmem>>, vector<128x128xf32>
    %cst = arith.constant dense<0.000000e+00> : vector<64x128xf32>
    %9 = tpu.matmul %7, %8, %cst {dimension_numbers = #tpu.dot_dimension_numbers<[1], [0], [0], [1], [0, 0, 1, 1], [], []>} : vector<64x128xf32>, vector<128x128xf32>, vector<64x128xf32> -> vector<64x128xf32>
    %c0_7 = arith.constant 0 : index
    %c0_8 = arith.constant 0 : index
    %10 = vector.load %arg5[%c0_7, %c0_8] : memref<1x128xf32, #tpu.memory_space<vmem>>, vector<1x128xf32>
    %11 = vector.broadcast %10 : vector<1x128xf32> to vector<64x128xf32>
    %12 = arith.addf %9, %11 : vector<64x128xf32>
    %cst_9 = arith.constant 0.000000e+00 : f32
    %13 = vector.broadcast %cst_9 : f32 to vector<64x128xf32>
    %14 = arith.maximumf %12, %13 : vector<64x128xf32>
    %c0_10 = arith.constant 0 : index
    %c0_11 = arith.constant 0 : index
    %15 = vector.load %arg6[%c0_10, %c0_11] : memref<128x128xf32, #tpu.memory_space<vmem>>, vector<128x128xf32>
    %cst_12 = arith.constant dense<0.000000e+00> : vector<64x128xf32>
    %16 = tpu.matmul %14, %15, %cst_12 {dimension_numbers = #tpu.dot_dimension_numbers<[1], [0], [0], [1], [0, 0, 1, 1], [], []>} : vector<64x128xf32>, vector<128x128xf32>, vector<64x128xf32> -> vector<64x128xf32>
    %c0_13 = arith.constant 0 : index
    %c0_14 = arith.constant 0 : index
    %17 = vector.load %arg7[%c0_13, %c0_14] : memref<1x128xf32, #tpu.memory_space<vmem>>, vector<1x128xf32>
    %18 = vector.broadcast %17 : vector<1x128xf32> to vector<64x128xf32>
    %19 = arith.addf %16, %18 : vector<64x128xf32>
    %c0_15 = arith.constant 0 : index
    %c0_16 = arith.constant 0 : index
    %20 = vector.load %arg8[%c0_15, %c0_16] : memref<64x128xf32, #tpu.memory_space<vmem>>, vector<64x128xf32>
    tpu.vector_store %arg8[%c0_15, %c0_16], %19 {strides = array<i32>} : memref<64x128xf32, #tpu.memory_space<vmem>>, vector<64x128xf32>,
    return
  }
  func.func @transform_0(%arg0: i32) -> (i32, i32) {
    %c0_i32 = arith.constant 0 : i32
    %c0_i32_0 = arith.constant 0 : i32
    return %arg0, %c0_i32 : i32, i32
  }
  func.func @transform_1(%arg0: i32) -> (i32, i32) {
    %c0_i32 = arith.constant 0 : i32
    %c0_i32_0 = arith.constant 0 : i32
    %c0_i32_1 = arith.constant 0 : i32
    return %c0_i32, %c0_i32_0 : i32, i32
  }
  func.func @transform_2(%arg0: i32) -> (i32, i32) {
    %c0_i32 = arith.constant 0 : i32
    %c0_i32_0 = arith.constant 0 : i32
    %c0_i32_1 = arith.constant 0 : i32
    return %c0_i32, %c0_i32_0 : i32, i32
  }
  func.func @transform_3(%arg0: i32) -> (i32, i32) {
    %c0_i32 = arith.constant 0 : i32
    %c0_i32_0 = arith.constant 0 : i32
    %c0_i32_1 = arith.constant 0 : i32
    return %c0_i32, %c0_i32_0 : i32, i32
  }
  func.func @transform_4(%arg0: i32) -> (i32, i32) {
    %c0_i32 = arith.constant 0 : i32
    %c0_i32_0 = arith.constant 0 : i32
    %c0_i32_1 = arith.constant 0 : i32
    return %c0_i32, %c0_i32_0 : i32, i32
  }
  func.func @transform_5(%arg0: i32) -> (i32, i32) {
    %c0_i32 = arith.constant 0 : i32
    %c0_i32_0 = arith.constant 0 : i32
    %c0_i32_1 = arith.constant 0 : i32
    return %c0_i32, %c0_i32_0 : i32, i32
  }
  func.func @transform_6(%arg0: i32) -> (i32, i32) {
    %c0_i32 = arith.constant 0 : i32
    %c0_i32_0 = arith.constant 0 : i32
    %c0_i32_1 = arith.constant 0 : i32
    return %c0_i32, %c0_i32_0 : i32, i32
  }
  func.func @transform_7(%arg0: i32) -> (i32, i32) {
    %c0_i32 = arith.constant 0 : i32
    %c0_i32_0 = arith.constant 0 : i32
    return %arg0, %c0_i32 : i32, i32
  }
}

</mosaic_0001>

<llo_original>
// kernel: tpu_custom_call.1
$region0: #{tpu_custom_call.1}
  #allocation0 [shape = 'u32[]', space=smem, size = 0x4, offset = 0x4, fixed_abs, tag = 'smem constant byte address 0x4 - core index']
  #allocation1 [shape = 'u32[144,128]{1,0:T(1,128)}', space=vmem, size = 0x12000, scoped, tag = 'internal scratch']
  %s0 = inlined_call_operand.vmem [shape: f32[256,1], index: 0, kind: input, shape index: {}]
  %s1 = inlined_call_operand.vmem [shape: f32[1,128], index: 1, kind: input, shape index: {}]
  %s2 = inlined_call_operand.vmem [shape: f32[1,128], index: 2, kind: input, shape index: {}]
  %s3 = inlined_call_operand.vmem [shape: f32[128,128], index: 3, kind: input, shape index: {}]
  %s4 = inlined_call_operand.vmem [shape: f32[1,128], index: 4, kind: input, shape index: {}]
  %s5 = inlined_call_operand.vmem [shape: f32[128,128], index: 5, kind: input, shape index: {}]
  %s6 = inlined_call_operand.vmem [shape: f32[1,128], index: 6, kind: input, shape index: {}]
  %s7 = inlined_call_operand.hbm [shape: f32[256,128], index: 7, kind: output, shape index: {}]
  %s8 = sld [smem:[#allocation0]]
  $region61: #{tpu_custom_call.1} parent=0
    _
  %s10 = ssub.s32 1, %s8
  %s11 = scalar_select 0, %s10, %s8
  $region1: #{tpu_custom_call.1} parent=0
    #allocation2 [shape = 'u8[65536]{0}', space=vmem, size = 0x10000, scoped, tag = 'output window, operand 0']
    #allocation3 [shape = 's32[2]{0}', space=sflag, size = 0x8, scoped, tag = 'scoped memory for tpu_custom_call.1']
    %12 = vsyncpa [#allocation3], 0
    %s13 = scalar_lea.sflag [#allocation3], 1
    %14 = vsyncpa %s13, 0
    loop: start=0, step=1, limit=6
    $region2: #{tpu_custom_call.1} parent=1 // loop_pre_header
      _
    $region3: #{tpu_custom_call.1} parent=1 // loop_header
      %s16 = sphi 0, %s20
      %p17 = scmp.ge.s32.totalorder %s16, 6
      %s26 = sphi 0, %s28
      %s29 = sphi 0, %s26
      %s30 = sphi 0, %s29
      %s46 = sphi 0, %s30
      %s50 = sphi 0, %s50
      %s52 = sphi 0, %s50
      %s53 = sphi 0, %s52
      %s67 = sphi 0, %s53
      %s71 = sphi 0, %s71
      %s73 = sphi 0, %s71
      %s74 = sphi 0, %s73
      %s88 = sphi 0, %s74
      %s92 = sphi 0, %s92
      %s94 = sphi 0, %s92
      %s95 = sphi 0, %s94
      %s109 = sphi 0, %s95
      %s113 = sphi 0, %s113
      %s115 = sphi 0, %s113
      %s116 = sphi 0, %s115
      %s130 = sphi 0, %s116
      %s134 = sphi 0, %s134
      %s136 = sphi 0, %s134
      %s137 = sphi 0, %s136
      %s151 = sphi 0, %s137
      %s155 = sphi 0, %s155
      %s157 = sphi 0, %s155
      %s158 = sphi 0, %s157
      %s172 = sphi 0, %s158
      %s178 = sphi 0, %s180
      %s181 = sphi 0, %s178
      %s182 = sphi 0, %s181
      %s198 = sphi 0, %s182
    $region4: #{tpu_custom_call.1} parent=1 // loop_header_branch
      %19 = sbr.rel (%p17) target = $region8
    $region5: #{tpu_custom_call.1} parent=1 // loop_body
      %s21 = ssub.s32 %s16, 1
      %s22 = ssub.s32 %s16, 2
      %s23 = sadd.s32 %s16, 1
      %s24 = ssub.s32 %s16, %s23
      %p25 = scmp.eq.s32.totalorder %s24, 0
      %s27 = sadd.s32 %s26, 1
      %s28 = scalar_select %p25, %s26, %s27
      %p31 = pneg %p25
      %p32 = scmp.eq.s32.totalorder %s16, 3
      %p33 = por %p31, %p32
      %p34 = scmp.ne.s32.totalorder %s26, %s29
      %p35 = scmp.eq.s32.totalorder %s16, 0
      %p36 = por %p34, %p35
      %p37 = scmp.ne.s32.totalorder %s26, %s29
      %p38 = scmp.eq.s32.totalorder %s21, 3
      %p39 = por %p37, %p38
      %p40 = scmp.ne.s32.totalorder %s29, %s30
      %p41 = scmp.eq.s32.totalorder %s21, 0
      %p42 = por %p40, %p41
      %p43 = scmp.ne.s32.totalorder %s29, %s30
      %p44 = scmp.eq.s32.totalorder %s22, 3
      %p45 = por %p43, %p44
      %p47 = scmp.ne.s32.totalorder %s30, %s46
      %p48 = scmp.eq.s32.totalorder %s22, 0
      %p49 = por %p47, %p48
      %s51 = sadd.s32 %s50, 1
      %p54 = scmp.eq.s32.totalorder %s16, 3
      %p55 = scmp.ne.s32.totalorder %s50, %s52
      %p56 = scmp.eq.s32.totalorder %s16, 0
      %p57 = por %p55, %p56
      %p58 = scmp.ne.s32.totalorder %s50, %s52
      %p59 = scmp.eq.s32.totalorder %s21, 3
      %p60 = por %p58, %p59
      %p61 = scmp.ne.s32.totalorder %s52, %s53
      %p62 = scmp.eq.s32.totalorder %s21, 0
      %p63 = por %p61, %p62
      %p64 = scmp.ne.s32.totalorder %s52, %s53
      %p65 = scmp.eq.s32.totalorder %s22, 3
      %p66 = por %p64, %p65
      %p68 = scmp.ne.s32.totalorder %s53, %s67
      %p69 = scmp.eq.s32.totalorder %s22, 0
      %p70 = por %p68, %p69
      %s72 = sadd.s32 %s71, 1
      %p75 = scmp.eq.s32.totalorder %s16, 3
      %p76 = scmp.ne.s32.totalorder %s71, %s73
      %p77 = scmp.eq.s32.totalorder %s16, 0
      %p78 = por %p76, %p77
      %p79 = scmp.ne.s32.totalorder %s71, %s73
      %p80 = scmp.eq.s32.totalorder %s21, 3
      %p81 = por %p79, %p80
      %p82 = scmp.ne.s32.totalorder %s73, %s74
      %p83 = scmp.eq.s32.totalorder %s21, 0
      %p84 = por %p82, %p83
      %p85 = scmp.ne.s32.totalorder %s73, %s74
      %p86 = scmp.eq.s32.totalorder %s22, 3
      %p87 = por %p85, %p86
      %p89 = scmp.ne.s32.totalorder %s74, %s88
      %p90 = scmp.eq.s32.totalorder %s22, 0
      %p91 = por %p89, %p90
      %s93 = sadd.s32 %s92, 1
      %p96 = scmp.eq.s32.totalorder %s16, 3
      %p97 = scmp.ne.s32.totalorder %s92, %s94
      %p98 = scmp.eq.s32.totalorder %s16, 0
      %p99 = por %p97, %p98
      %p100 = scmp.ne.s32.totalorder %s92, %s94
      %p101 = scmp.eq.s32.totalorder %s21, 3
      %p102 = por %p100, %p101
      %p103 = scmp.ne.s32.totalorder %s94, %s95
      %p104 = scmp.eq.s32.totalorder %s21, 0
      %p105 = por %p103, %p104
      %p106 = scmp.ne.s32.totalorder %s94, %s95
      %p107 = scmp.eq.s32.totalorder %s22, 3
      %p108 = por %p106, %p107
      %p110 = scmp.ne.s32.totalorder %s95, %s109
      %p111 = scmp.eq.s32.totalorder %s22, 0
      %p112 = por %p110, %p111
      %s114 = sadd.s32 %s113, 1
      %p117 = scmp.eq.s32.totalorder %s16, 3
      %p118 = scmp.ne.s32.totalorder %s113, %s115
      %p119 = scmp.eq.s32.totalorder %s16, 0
      %p120 = por %p118, %p119
      %p121 = scmp.ne.s32.totalorder %s113, %s115
      %p122 = scmp.eq.s32.totalorder %s21, 3
      %p123 = por %p121, %p122
      %p124 = scmp.ne.s32.totalorder %s115, %s116
      %p125 = scmp.eq.s32.totalorder %s21, 0
      %p126 = por %p124, %p125
      %p127 = scmp.ne.s32.totalorder %s115, %s116
      %p128 = scmp.eq.s32.totalorder %s22, 3
      %p129 = por %p127, %p128
      %p131 = scmp.ne.s32.totalorder %s116, %s130
      %p132 = scmp.eq.s32.totalorder %s22, 0
      %p133 = por %p131, %p132
      %s135 = sadd.s32 %s134, 1
      %p138 = scmp.eq.s32.totalorder %s16, 3
      %p139 = scmp.ne.s32.totalorder %s134, %s136
      %p140 = scmp.eq.s32.totalorder %s16, 0
      %p141 = por %p139, %p140
      %p142 = scmp.ne.s32.totalorder %s134, %s136
      %p143 = scmp.eq.s32.totalorder %s21, 3
      %p144 = por %p142, %p143
      %p145 = scmp.ne.s32.totalorder %s136, %s137
      %p146 = scmp.eq.s32.totalorder %s21, 0
      %p147 = por %p145, %p146
      %p148 = scmp.ne.s32.totalorder %s136, %s137
      %p149 = scmp.eq.s32.totalorder %s22, 3
      %p150 = por %p148, %p149
      %p152 = scmp.ne.s32.totalorder %s137, %s151
      %p153 = scmp.eq.s32.totalorder %s22, 0
      %p154 = por %p152, %p153
      %s156 = sadd.s32 %s155, 1
      %p159 = scmp.eq.s32.totalorder %s16, 3
      %p160 = scmp.ne.s32.totalorder %s155, %s157
      %p161 = scmp.eq.s32.totalorder %s16, 0
      %p162 = por %p160, %p161
      %p163 = scmp.ne.s32.totalorder %s155, %s157
      %p164 = scmp.eq.s32.totalorder %s21, 3
      %p165 = por %p163, %p164
      %p166 = scmp.ne.s32.totalorder %s157, %s158
      %p167 = scmp.eq.s32.totalorder %s21, 0
      %p168 = por %p166, %p167
      %p169 = scmp.ne.s32.totalorder %s157, %s158
      %p170 = scmp.eq.s32.totalorder %s22, 3
      %p171 = por %p169, %p170
      %p173 = scmp.ne.s32.totalorder %s158, %s172
      %p174 = scmp.eq.s32.totalorder %s22, 0
      %p175 = por %p173, %p174
      %s176 = ssub.s32 %s16, %s23
      %p177 = scmp.eq.s32.totalorder %s176, 0
      %s179 = sadd.s32 %s178, 1
      %s180 = scalar_select %p177, %s178, %s179
      %p183 = pneg %p177
      %p184 = scmp.eq.s32.totalorder %s16, 3
      %p185 = por %p183, %p184
      %p186 = scmp.ne.s32.totalorder %s178, %s181
      %p187 = scmp.eq.s32.totalorder %s16, 0
      %p188 = por %p186, %p187
      %p189 = scmp.ne.s32.totalorder %s178, %s181
      %p190 = scmp.eq.s32.totalorder %s21, 3
      %p191 = por %p189, %p190
      %p192 = scmp.ne.s32.totalorder %s181, %s182
      %p193 = scmp.eq.s32.totalorder %s21, 0
      %p194 = por %p192, %p193
      %p195 = scmp.ne.s32.totalorder %s181, %s182
      %p196 = scmp.eq.s32.totalorder %s22, 3
      %p197 = por %p195, %p196
      %p199 = scmp.ne.s32.totalorder %s182, %s198
      %p200 = scmp.eq.s32.totalorder %s22, 0
      %p201 = por %p199, %p200
      %p202 = scmp.le.s32.totalorder 1, %s16
      %p203 = scmp.lt.s32.totalorder %s16, 5
      %p204 = pnand %p202, %p203
      %p205 = pneg %p204
      // Predicated region
      $region9: #{tpu_custom_call.1} parent=5 // pred_check
        _
      $region10: #{tpu_custom_call.1} parent=5 // pred_check_branch
        %207 = sbr.rel (%p204) target = $region12
      $region11: #{tpu_custom_call.1} parent=5 // pred_region
        %s208 = ssub.s32 %s16, 1
        // Predicated region
        $region13: #{tpu_custom_call.1} parent=11 // pred_check
          %p209 = pneg %p63
        $region14: #{tpu_custom_call.1} parent=11 // pred_check_branch
          %211 = sbr.rel (%p209) target = $region16
        $region15: #{tpu_custom_call.1} parent=11 // pred_region
          _
        $region16: #{tpu_custom_call.1} parent=11 // pred_fallthru
          _
        // Predicated region
        $region17: #{tpu_custom_call.1} parent=11 // pred_check
          %p212 = pneg %p84
        $region18: #{tpu_custom_call.1} parent=11 // pred_check_branch
          %214 = sbr.rel (%p212) target = $region20
        $region19: #{tpu_custom_call.1} parent=11 // pred_region
          _
        $region20: #{tpu_custom_call.1} parent=11 // pred_fallthru
          _
        // Predicated region
        $region21: #{tpu_custom_call.1} parent=11 // pred_check
          %p215 = pneg %p105
        $region22: #{tpu_custom_call.1} parent=11 // pred_check_branch
          %217 = sbr.rel (%p215) target = $region24
        $region23: #{tpu_custom_call.1} parent=11 // pred_region
          _
        $region24: #{tpu_custom_call.1} parent=11 // pred_fallthru
          _
        // Predicated region
        $region25: #{tpu_custom_call.1} parent=11 // pred_check
          %p218 = pneg %p126
        $region26: #{tpu_custom_call.1} parent=11 // pred_check_branch
          %220 = sbr.rel (%p218) target = $region28
        $region27: #{tpu_custom_call.1} parent=11 // pred_region
          _
        $region28: #{tpu_custom_call.1} parent=11 // pred_fallthru
          _
        // Predicated region
        $region29: #{tpu_custom_call.1} parent=11 // pred_check
          %p221 = pneg %p147
        $region30: #{tpu_custom_call.1} parent=11 // pred_check_branch
          %223 = sbr.rel (%p221) target = $region32
        $region31: #{tpu_custom_call.1} parent=11 // pred_region
          _
        $region32: #{tpu_custom_call.1} parent=11 // pred_fallthru
          _
        // Predicated region
        $region33: #{tpu_custom_call.1} parent=11 // pred_check
          %p224 = pneg %p168
        $region34: #{tpu_custom_call.1} parent=11 // pred_check_branch
          %226 = sbr.rel (%p224) target = $region36
        $region35: #{tpu_custom_call.1} parent=11 // pred_region
          _
        $region36: #{tpu_custom_call.1} parent=11 // pred_fallthru
          _
      $region12: #{tpu_custom_call.1} parent=5 // pred_fallthru
        _
      %p227 = scmp.lt.s32.totalorder %s16, 4
      // Predicated region
      $region37: #{tpu_custom_call.1} parent=5 // pred_check
        %p228 = pneg %p227
      $region38: #{tpu_custom_call.1} parent=5 // pred_check_branch
        %230 = sbr.rel (%p228) target = $region40
      $region39: #{tpu_custom_call.1} parent=5 // pred_region
        // Predicated region
        $region41: #{tpu_custom_call.1} parent=39 // pred_check
          %p231 = pneg %p36
        $region42: #{tpu_custom_call.1} parent=39 // pred_check_branch
          %233 = sbr.rel (%p231) target = $region44
        $region43: #{tpu_custom_call.1} parent=39 // pred_region
          %s234 = smul.u32 8, %s16
          %p235 = scmp.lt.s32.totalorder %s234, 31
          %s236 = scalar_select %p235, %s234, 31
          %s237 = smul.addr %s236, 8
          %s238 = scalar_lea.vmem %s0, %s237
          %s239 = smul.u32 8, %s16
        $region44: #{tpu_custom_call.1} parent=39 // pred_fallthru
          _
      $region40: #{tpu_custom_call.1} parent=5 // pred_fallthru
        _
      %p240 = scmp.le.s32.totalorder 1, %s16
      %p241 = scmp.lt.s32.totalorder %s16, 5
      %p242 = pnand %p240, %p241
      %p243 = pneg %p242
      // Predicated region
      $region45: #{tpu_custom_call.1} parent=5 // pred_check
        _
      $region46: #{tpu_custom_call.1} parent=5 // pred_check_branch
        %245 = sbr.rel (%p242) target = $region48
      $region47: #{tpu_custom_call.1} parent=5 // pred_region
        %s246 = ssub.s32 %s16, 1
        %s247 = smul.u32 8, %s21
        %p248 = scmp.lt.s32.totalorder %s247, 31
        %s249 = scalar_select %p248, %s247, 31
        %s250 = smul.addr %s249, 8
        %s251 = scalar_lea.vmem %s0, %s250
        %p252 = pneg %p42
        %p253 = pneg %p39
        %p254 = pneg %p63
        %p255 = pneg %p60
        %p256 = pneg %p84
        %p257 = pneg %p81
        %p258 = pneg %p105
        %p259 = pneg %p102
        %p260 = pneg %p126
        %p261 = pneg %p123
        %p262 = pneg %p147
        %p263 = pneg %p144
        %p264 = pneg %p168
        %p265 = pneg %p165
        %p266 = pneg %p194
        %p267 = pneg %p191
        %s268 = sand.u32 %s181, 1
        %s269 = scalar_lea.sflag [#allocation3], %s268
        %s270 = sand.u32 %s181, 1
        %s271 = smul.addr %s270, 64
        %s272 = scalar_lea.vmem [#allocation2], %s271
        %s273 = smul.u32 8, %s21
        %p274 = scmp.lt.s32.totalorder %s273, 31
        %s275 = scalar_select %p274, %s273, 31
        %s276 = smul.addr %s275, 8
        %s277 = scalar_lea.vmem %s0, %s276
        %s278 = smul.u32 8, %s21
        %s279 = smul.u32 8, %s21
        %v280 = vld [vmem:[%s277] sm:$0xff]
        %v281 = vld [vmem:[%s277 + $0x8] sm:$0xff]
        %v282 = vld [vmem:[%s277 + $0x10] sm:$0xff]
        %v283 = vld [vmem:[%s277 + $0x18] sm:$0xff]
        %v284 = vld [vmem:[%s277 + $0x20] sm:$0xff]
        %v285 = vld [vmem:[%s277 + $0x28] sm:$0xff]
        %v286 = vld [vmem:[%s277 + $0x30] sm:$0xff]
        %v287 = vld [vmem:[%s277 + $0x38] sm:$0xff]
        %v288 = vld [vmem:[%s1] sm:$0x1]
        %290 = vset.pattern.permute.xlu0 0
        %291 = vperm.xlu0 %290, %v280
        %v292 = vpop.permute.xlu0 %291
        %295 = vset.pattern.permute.xlu0 0
        %296 = vperm.xlu0 %295, %v281
        %v297 = vpop.permute.xlu0 %296
        %300 = vset.pattern.permute.xlu0 0
        %301 = vperm.xlu0 %300, %v282
        %v302 = vpop.permute.xlu0 %301
        %305 = vset.pattern.permute.xlu0 0
        %306 = vperm.xlu0 %305, %v283
        %v307 = vpop.permute.xlu0 %306
        %310 = vset.pattern.permute.xlu0 0
        %311 = vperm.xlu0 %310, %v284
        %v312 = vpop.permute.xlu0 %311
        %315 = vset.pattern.permute.xlu0 0
        %316 = vperm.xlu0 %315, %v285
        %v317 = vpop.permute.xlu0 %316
        %320 = vset.pattern.permute.xlu0 0
        %321 = vperm.xlu0 %320, %v286
        %v322 = vpop.permute.xlu0 %321
        %325 = vset.pattern.permute.xlu0 0
        %326 = vperm.xlu0 %325, %v287
        %v327 = vpop.permute.xlu0 %326
        %v330 = vlaneseq
        %v331 = vshrl.u32 %v330, 7
        %v332 = vsub.s32 0, %v331
        %v333 = vrot.slane %v288, %v332
        %v335 = vmul.f32 %v292, %v333
        %v336 = vmul.f32 %v297, %v333
        %v337 = vmul.f32 %v302, %v333
        %v338 = vmul.f32 %v307, %v333
        %v339 = vmul.f32 %v312, %v333
        %v340 = vmul.f32 %v317, %v333
        %v341 = vmul.f32 %v322, %v333
        %v342 = vmul.f32 %v327, %v333
        %v343 = vld [vmem:[%s2] sm:$0x1]
        %v345 = vlaneseq
        %v346 = vshrl.u32 %v345, 7
        %v347 = vsub.s32 0, %v346
        %v348 = vrot.slane %v343, %v347
        %v350 = vadd.f32 %v335, %v348
        %v351 = vadd.f32 %v336, %v348
        %v352 = vadd.f32 %v337, %v348
        %v353 = vadd.f32 %v338, %v348
        %v354 = vadd.f32 %v339, %v348
        %v355 = vadd.f32 %v340, %v348
        %v356 = vadd.f32 %v341, %v348
        %v357 = vadd.f32 %v342, %v348
        %v358 = vld [vmem:[%s3] sm:$0xff]
        %v359 = vld [vmem:[%s3 + $0x8] sm:$0xff]
        %v360 = vld [vmem:[%s3 + $0x10] sm:$0xff]
        %v361 = vld [vmem:[%s3 + $0x18] sm:$0xff]
        %v362 = vld [vmem:[%s3 + $0x20] sm:$0xff]
        %v363 = vld [vmem:[%s3 + $0x28] sm:$0xff]
        %v364 = vld [vmem:[%s3 + $0x30] sm:$0xff]
        %v365 = vld [vmem:[%s3 + $0x38] sm:$0xff]
        %v366 = vld [vmem:[%s3 + $0x40] sm:$0xff]
        %v367 = vld [vmem:[%s3 + $0x48] sm:$0xff]
        %v368 = vld [vmem:[%s3 + $0x50] sm:$0xff]
        %v369 = vld [vmem:[%s3 + $0x58] sm:$0xff]
        %v370 = vld [vmem:[%s3 + $0x60] sm:$0xff]
        %v371 = vld [vmem:[%s3 + $0x68] sm:$0xff]
        %v372 = vld [vmem:[%s3 + $0x70] sm:$0xff]
        %v373 = vld [vmem:[%s3 + $0x78] sm:$0xff]
        %v374 = vld [vmem:[%s4] sm:$0x1]
        %v376 = vlaneseq
        %v377 = vshrl.u32 %v376, 7
        %v378 = vsub.s32 0, %v377
        %v379 = vrot.slane %v374, %v378
        %381 = vmatprep.subr.mxu0 0.0
        %382 = vmatpush1.msra.mxu0 %v358
        %383 = vmatprep.subr.mxu0 0.0
        %384 = vmatpush1.msra.mxu0 %v359
        %385 = vmatprep.subr.mxu0 0.0
        %386 = vmatpush1.msra.mxu0 %v360
        %387 = vmatprep.subr.mxu0 0.0
        %388 = vmatpush1.msra.mxu0 %v361
        %389 = vmatprep.subr.mxu0 0.0
        %390 = vmatpush1.msra.mxu0 %v362
        %391 = vmatprep.subr.mxu0 0.0
        %392 = vmatpush1.msra.mxu0 %v363
        %393 = vmatprep.subr.mxu0 0.0
        %394 = vmatpush1.msra.mxu0 %v364
        %395 = vmatprep.subr.mxu0 0.0
        %396 = vmatpush1.msra.mxu0 %v365
        %397 = vmatprep.subr.mxu0 0.0
        %398 = vmatpush1.msra.mxu0 %v366
        %399 = vmatprep.subr.mxu0 0.0
        %400 = vmatpush1.msra.mxu0 %v367
        %401 = vmatprep.subr.mxu0 0.0
        %402 = vmatpush1.msra.mxu0 %v368
        %403 = vmatprep.subr.mxu0 0.0
        %404 = vmatpush1.msra.mxu0 %v369
        %405 = vmatprep.subr.mxu0 0.0
        %406 = vmatpush1.msra.mxu0 %v370
        %407 = vmatprep.subr.mxu0 0.0
        %408 = vmatpush1.msra.mxu0 %v371
        %409 = vmatprep.subr.mxu0 0.0
        %410 = vmatpush1.msra.mxu0 %v372
        %411 = vmatprep.subr.mxu0 0.0
        %412 = vmatpush1.msra.mxu0 %v373
        %413 = vmatprep.subr.mxu0 0.0
        %414 = vmatpush1.msra.mxu0 0.0
        %415 = vmatprep.subr.mxu0 0.0
        %416 = vmatpush1.msra.mxu0 0.0
        %417 = vmatprep.subr.mxu0 0.0
        %418 = vmatpush1.msra.mxu0 0.0
        %419 = vmatprep.subr.mxu0 0.0
        %420 = vmatpush1.msra.mxu0 0.0
        %421 = vmatprep.subr.mxu0 0.0
        %422 = vmatpush1.msra.mxu0 0.0
        %423 = vmatprep.subr.mxu0 0.0
        %424 = vmatpush1.msra.mxu0 0.0
        %425 = vmatprep.subr.mxu0 0.0
        %426 = vmatpush1.msra.mxu0 0.0
        %427 = vmatprep.subr.mxu0 0.0
        %428 = vmatpush1.msra.mxu0 0.0
        %429 = vmatprep.subr.mxu0 0.0
        %430 = vmatpush1.msra.mxu0 0.0
        %431 = vmatprep.subr.mxu0 0.0
        %432 = vmatpush1.msra.mxu0 0.0
        %433 = vmatprep.subr.mxu0 0.0
        %434 = vmatpush1.msra.mxu0 0.0
        %435 = vmatprep.subr.mxu0 0.0
        %436 = vmatpush1.msra.mxu0 0.0
        %437 = vmatprep.subr.mxu0 0.0
        %438 = vmatpush1.msra.mxu0 0.0
        %439 = vmatprep.subr.mxu0 0.0
        %440 = vmatpush1.msra.mxu0 0.0
        %441 = vmatprep.subr.mxu0 0.0
        %442 = vmatpush1.msra.mxu0 0.0
        %443 = vmatprep.subr.mxu0 0.0
        %444 = vmatpush1.msra.mxu0 0.0
        %445 = vmatprep.mubr.f32.mxu0 0.0
        %446 = vmatmul.mubr.f32.gmra.mrb[0].mxu0 %v350
        %v447 = vpop.f32.mrb[0].mxu0
        %v448 = vadd.f32 %v379, %v447
        %v449 = vpop.f32.mrb[0].mxu0
        %450 = vmatprep.mubr.f32.mxu0 0.0
        %451 = vmatmul.mubr.f32.gmra.mrb[0].mxu0 %v351
        %v452 = vpop.f32.mrb[0].mxu0
        %v453 = vadd.f32 %v379, %v452
        %v454 = vpop.f32.mrb[0].mxu0
        %455 = vmatprep.mubr.f32.mxu0 0.0
        %456 = vmatmul.mubr.f32.gmra.mrb[0].mxu0 %v352
        %v457 = vpop.f32.mrb[0].mxu0
        %v458 = vadd.f32 %v379, %v457
        %v459 = vpop.f32.mrb[0].mxu0
        %460 = vmatprep.mubr.f32.mxu0 0.0
        %461 = vmatmul.mubr.f32.gmra.mrb[0].mxu0 %v353
        %v462 = vpop.f32.mrb[0].mxu0
        %v463 = vadd.f32 %v379, %v462
        %v464 = vpop.f32.mrb[0].mxu0
        %465 = vmatprep.mubr.f32.mxu0 0.0
        %466 = vmatmul.mubr.f32.gmra.mrb[0].mxu0 %v354
        %v467 = vpop.f32.mrb[0].mxu0
        %v468 = vadd.f32 %v379, %v467
        %v469 = vpop.f32.mrb[0].mxu0
        %470 = vmatprep.mubr.f32.mxu0 0.0
        %471 = vmatmul.mubr.f32.gmra.mrb[0].mxu0 %v355
        %v472 = vpop.f32.mrb[0].mxu0
        %v473 = vadd.f32 %v379, %v472
        %v474 = vpop.f32.mrb[0].mxu0
        %475 = vmatprep.mubr.f32.mxu0 0.0
        %476 = vmatmul.mubr.f32.gmra.mrb[0].mxu0 %v356
        %v477 = vpop.f32.mrb[0].mxu0
        %v478 = vadd.f32 %v379, %v477
        %v479 = vpop.f32.mrb[0].mxu0
        %480 = vmatprep.mubr.f32.mxu0 0.0
        %481 = vmatmul.mubr.f32.gmra.mrb[0].mxu0 %v357
        %v482 = vpop.f32.mrb[0].mxu0
        %v483 = vadd.f32 %v379, %v482
        %v484 = vpop.f32.mrb[0].mxu0
        %485 = vdwg.mxu0
        %v486 = vmax.f32 %v448, 0.0
        %v487 = vmax.f32 %v453, 0.0
        %v488 = vmax.f32 %v458, 0.0
        %v489 = vmax.f32 %v463, 0.0
        %v490 = vmax.f32 %v468, 0.0
        %v491 = vmax.f32 %v473, 0.0
        %v492 = vmax.f32 %v478, 0.0
        %v493 = vmax.f32 %v483, 0.0
        %v494 = vld [vmem:[%s5] sm:$0xff]
        %v495 = vld [vmem:[%s5 + $0x8] sm:$0xff]
        %v496 = vld [vmem:[%s5 + $0x10] sm:$0xff]
        %v497 = vld [vmem:[%s5 + $0x18] sm:$0xff]
        %v498 = vld [vmem:[%s5 + $0x20] sm:$0xff]
        %v499 = vld [vmem:[%s5 + $0x28] sm:$0xff]
        %v500 = vld [vmem:[%s5 + $0x30] sm:$0xff]
        %v501 = vld [vmem:[%s5 + $0x38] sm:$0xff]
        %v502 = vld [vmem:[%s5 + $0x40] sm:$0xff]
        %v503 = vld [vmem:[%s5 + $0x48] sm:$0xff]
        %v504 = vld [vmem:[%s5 + $0x50] sm:$0xff]
        %v505 = vld [vmem:[%s5 + $0x58] sm:$0xff]
        %v506 = vld [vmem:[%s5 + $0x60] sm:$0xff]
        %v507 = vld [vmem:[%s5 + $0x68] sm:$0xff]
        %v508 = vld [vmem:[%s5 + $0x70] sm:$0xff]
        %v509 = vld [vmem:[%s5 + $0x78] sm:$0xff]
        %v510 = vld [vmem:[%s6] sm:$0x1]
        %v512 = vlaneseq
        %v513 = vshrl.u32 %v512, 7
        %v514 = vsub.s32 0, %v513
        %v515 = vrot.slane %v510, %v514
        %517 = vmatprep.subr.mxu0 0.0
        %518 = vmatpush1.msra.mxu0 %v494
        %519 = vmatprep.subr.mxu0 0.0
        %520 = vmatpush1.msra.mxu0 %v495
        %521 = vmatprep.subr.mxu0 0.0
        %522 = vmatpush1.msra.mxu0 %v496
        %523 = vmatprep.subr.mxu0 0.0
        %524 = vmatpush1.msra.mxu0 %v497
        %525 = vmatprep.subr.mxu0 0.0
        %526 = vmatpush1.msra.mxu0 %v498
        %527 = vmatprep.subr.mxu0 0.0
        %528 = vmatpush1.msra.mxu0 %v499
        %529 = vmatprep.subr.mxu0 0.0
        %530 = vmatpush1.msra.mxu0 %v500
        %531 = vmatprep.subr.mxu0 0.0
        %532 = vmatpush1.msra.mxu0 %v501
        %533 = vmatprep.subr.mxu0 0.0
        %534 = vmatpush1.msra.mxu0 %v502
        %535 = vmatprep.subr.mxu0 0.0
        %536 = vmatpush1.msra.mxu0 %v503
        %537 = vmatprep.subr.mxu0 0.0
        %538 = vmatpush1.msra.mxu0 %v504
        %539 = vmatprep.subr.mxu0 0.0
        %540 = vmatpush1.msra.mxu0 %v505
        %541 = vmatprep.subr.mxu0 0.0
        %542 = vmatpush1.msra.mxu0 %v506
        %543 = vmatprep.subr.mxu0 0.0
        %544 = vmatpush1.msra.mxu0 %v507
        %545 = vmatprep.subr.mxu0 0.0
        %546 = vmatpush1.msra.mxu0 %v508
        %547 = vmatprep.subr.mxu0 0.0
        %548 = vmatpush1.msra.mxu0 %v509
        %549 = vmatprep.subr.mxu0 0.0
        %550 = vmatpush1.msra.mxu0 0.0
        %551 = vmatprep.subr.mxu0 0.0
        %552 = vmatpush1.msra.mxu0 0.0
        %553 = vmatprep.subr.mxu0 0.0
        %554 = vmatpush1.msra.mxu0 0.0
        %555 = vmatprep.subr.mxu0 0.0
        %556 = vmatpush1.msra.mxu0 0.0
        %557 = vmatprep.subr.mxu0 0.0
        %558 = vmatpush1.msra.mxu0 0.0
        %559 = vmatprep.subr.mxu0 0.0
        %560 = vmatpush1.msra.mxu0 0.0
        %561 = vmatprep.subr.mxu0 0.0
        %562 = vmatpush1.msra.mxu0 0.0
        %563 = vmatprep.subr.mxu0 0.0
        %564 = vmatpush1.msra.mxu0 0.0
        %565 = vmatprep.subr.mxu0 0.0
        %566 = vmatpush1.msra.mxu0 0.0
        %567 = vmatprep.subr.mxu0 0.0
        %568 = vmatpush1.msra.mxu0 0.0
        %569 = vmatprep.subr.mxu0 0.0
        %570 = vmatpush1.msra.mxu0 0.0
        %571 = vmatprep.subr.mxu0 0.0
        %572 = vmatpush1.msra.mxu0 0.0
        %573 = vmatprep.subr.mxu0 0.0
        %574 = vmatpush1.msra.mxu0 0.0
        %575 = vmatprep.subr.mxu0 0.0
        %576 = vmatpush1.msra.mxu0 0.0
        %577 = vmatprep.subr.mxu0 0.0
        %578 = vmatpush1.msra.mxu0 0.0
        %579 = vmatprep.subr.mxu0 0.0
        %580 = vmatpush1.msra.mxu0 0.0
        %581 = vmatprep.mubr.f32.mxu0 0.0
        %582 = vmatmul.mubr.f32.gmra.mrb[0].mxu0 %v486
        %v583 = vpop.f32.mrb[0].mxu0
        %v584 = vadd.f32 %v515, %v583
        %v585 = vpop.f32.mrb[0].mxu0
        %586 = vmatprep.mubr.f32.mxu0 0.0
        %587 = vmatmul.mubr.f32.gmra.mrb[0].mxu0 %v487
        %v588 = vpop.f32.mrb[0].mxu0
        %v589 = vadd.f32 %v515, %v588
        %v590 = vpop.f32.mrb[0].mxu0
        %591 = vmatprep.mubr.f32.mxu0 0.0
        %592 = vmatmul.mubr.f32.gmra.mrb[0].mxu0 %v488
        %v593 = vpop.f32.mrb[0].mxu0
        %v594 = vadd.f32 %v515, %v593
        %v595 = vpop.f32.mrb[0].mxu0
        %596 = vmatprep.mubr.f32.mxu0 0.0
        %597 = vmatmul.mubr.f32.gmra.mrb[0].mxu0 %v489
        %v598 = vpop.f32.mrb[0].mxu0
        %v599 = vadd.f32 %v515, %v598
        %v600 = vpop.f32.mrb[0].mxu0
        %601 = vmatprep.mubr.f32.mxu0 0.0
        %602 = vmatmul.mubr.f32.gmra.mrb[0].mxu0 %v490
        %v603 = vpop.f32.mrb[0].mxu0
        %v604 = vadd.f32 %v515, %v603
        %v605 = vpop.f32.mrb[0].mxu0
        %606 = vmatprep.mubr.f32.mxu0 0.0
        %607 = vmatmul.mubr.f32.gmra.mrb[0].mxu0 %v491
        %v608 = vpop.f32.mrb[0].mxu0
        %v609 = vadd.f32 %v515, %v608
        %v610 = vpop.f32.mrb[0].mxu0
        %611 = vmatprep.mubr.f32.mxu0 0.0
        %612 = vmatmul.mubr.f32.gmra.mrb[0].mxu0 %v492
        %v613 = vpop.f32.mrb[0].mxu0
        %v614 = vadd.f32 %v515, %v613
        %v615 = vpop.f32.mrb[0].mxu0
        %616 = vmatprep.mubr.f32.mxu0 0.0
        %617 = vmatmul.mubr.f32.gmra.mrb[0].mxu0 %v493
        %v618 = vpop.f32.mrb[0].mxu0
        %v619 = vadd.f32 %v515, %v618
        %v620 = vpop.f32.mrb[0].mxu0
        %621 = vdwg.mxu0
        %622 = vst [vmem:[%s272] sm:$0xff] %v584
        %623 = vst [vmem:[%s272 + $0x8] sm:$0xff] %v589
        %624 = vst [vmem:[%s272 + $0x10] sm:$0xff] %v594
        %625 = vst [vmem:[%s272 + $0x18] sm:$0xff] %v599
        %626 = vst [vmem:[%s272 + $0x20] sm:$0xff] %v604
        %627 = vst [vmem:[%s272 + $0x28] sm:$0xff] %v609
        %628 = vst [vmem:[%s272 + $0x30] sm:$0xff] %v614
        %629 = vst [vmem:[%s272 + $0x38] sm:$0xff] %v619
        %s630 = sand.u32 %s181, 1
        %s631 = scalar_lea.sflag [#allocation3], %s630
        %s632 = sand.u32 %s181, 1
        %s633 = smul.addr %s632, 64
        %s634 = scalar_lea.vmem [#allocation2], %s633
        // Predicated region
        $region49: #{tpu_custom_call.1} parent=47 // pred_check
          %p635 = pneg %p191
        $region50: #{tpu_custom_call.1} parent=47 // pred_check_branch
          %637 = sbr.rel (%p635) target = $region52
        $region51: #{tpu_custom_call.1} parent=47 // pred_region
          %s638 = smul.u32 8, %s21
          %s640 = ssub.s32 1024, 1024
          %641 = vsyncadd %s631, %s640
          %s642 = smul.addr %s638, 128
          %s643 = scalar_lea.hbm %s7, %s642
          %s644 = sshll.u32 %s634, 4
          %s645 = int_to_ptr.vmem [resolvable:$true] %s644
          %650 = dma.vmem_to_hbm [thread:$0]  %s645, 1024, %s643, %s631, 128, 128, 8
        $region52: #{tpu_custom_call.1} parent=47 // pred_fallthru
          _
      $region48: #{tpu_custom_call.1} parent=5 // pred_fallthru
        _
      %p651 = scmp.le.s32.totalorder 2, %s16
      // Predicated region
      $region53: #{tpu_custom_call.1} parent=5 // pred_check
        %p652 = pneg %p651
      $region54: #{tpu_custom_call.1} parent=5 // pred_check_branch
        %654 = sbr.rel (%p652) target = $region56
      $region55: #{tpu_custom_call.1} parent=5 // pred_region
        %s655 = ssub.s32 %s16, 2
        // Predicated region
        $region57: #{tpu_custom_call.1} parent=55 // pred_check
          %p656 = pneg %p197
        $region58: #{tpu_custom_call.1} parent=55 // pred_check_branch
          %658 = sbr.rel (%p656) target = $region60
        $region59: #{tpu_custom_call.1} parent=55 // pred_region
          %s659 = sand.u32 %s182, 1
          %s660 = scalar_lea.sflag [#allocation3], %s659
          %s661 = sand.u32 %s182, 1
          %s662 = smul.addr %s661, 64
          %s663 = scalar_lea.vmem [#allocation2], %s662
          %664 = dma.done %s660, 1024
        $region60: #{tpu_custom_call.1} parent=55 // pred_fallthru
          _
      $region56: #{tpu_custom_call.1} parent=5 // pred_fallthru
        _
    $region6: #{tpu_custom_call.1} parent=1 // loop_footer
      %s20 = sadd.s32 1, %s16
    $region7: #{tpu_custom_call.1} parent=1 // loop_footer_branch
      %15 = sbr.rel target = $region3
    $region8: #{tpu_custom_call.1} parent=1 // loop_exit
      _
    %665 = vsyncpa [#allocation3], 1
    %s666 = scalar_lea.sflag [#allocation3], 1
    %667 = vsyncpa %s666, 1

</llo_original>
